<compile_context>
chip_gen: v5e
topology: v5e:2x2
jax: 0.10.0
libtpu: 0.0.40
codegen_flags: <defaults>
</compile_context>

<pallas_src>
import jax
import jax.numpy as jnp
from jax.experimental import pallas as pl
from jax.experimental.pallas import tpu as pltpu

STATE_DIM = 16
ACTION_DIM = 4
IN_DIM = STATE_DIM + ACTION_DIM
KP = 32            # fc1 input width padded with zeros (aligned loads, exact math)
HIDDEN = 256
OUT_DIM = 1


def _round_up(n, m):
    return ((n + m - 1) // m) * m


def _q_kernel(x_ref, w1_ref, b1_ref, w2_ref, b2_ref, w3_ref, b3_ref, out_ref):
    # x_ref: [TB, KP] bf16 batch tile; weights bf16 (VMEM-resident); biases f32.
    x = x_ref[...]

    # fc1 + ReLU  (bf16 operands, f32 MXU accumulation, elementwise in f32)
    h1 = jnp.dot(x, w1_ref[...], preferred_element_type=jnp.float32) + b1_ref[...]
    h1 = jnp.maximum(h1, 0.0).astype(jnp.bfloat16)

    # fc2 + ReLU
    h2 = jnp.dot(h1, w2_ref[...], preferred_element_type=jnp.float32) + b2_ref[...]
    h2 = jnp.maximum(h2, 0.0).astype(jnp.bfloat16)

    # fc3 as w3 @ h2.T -> [1, TB]: batch lands on the lane axis, so the output
    # store is lane-dense / unmasked (same pattern as q @ k.T in attention).
    q = jnp.dot(w3_ref[...], h2.T, preferred_element_type=jnp.float32)   # [1, TB]
    out_ref[...] = q + b3_ref[...]                                       # (1,1) broadcast


def q_forward(s, a, params, tb=1024):
    """Forward pass of the Q module. s: [..., state_dim], a: [..., action_dim] -> [N, 1]."""
    s = s.reshape(-1, STATE_DIM).astype(jnp.float32)
    a = a.reshape(-1, ACTION_DIM).astype(jnp.float32)
    B = s.shape[0]

    # Batch tile: multiple of 256 (MXU/vreg friendly), never larger than needed.
    tb = max(256, _round_up(tb, 256))
    tb = min(tb, _round_up(B, 256))
    Bp = _round_up(B, tb)

    # cat(s, a) in the wrapper; zero-pad features to KP and batch to Bp.
    x = jnp.concatenate((s, a), axis=-1)                          # [B, 20]
    x = jnp.pad(x, ((0, Bp - B), (0, KP - IN_DIM)))               # [Bp, KP]
    x = x.astype(jnp.bfloat16)

    w1, b1, w2, b2, w3, b3 = params
    # PyTorch Linear weights are [out, in]; transpose to [in, out] for x @ W.
    w1p = (jnp.zeros((KP, HIDDEN), jnp.float32)
           .at[:IN_DIM].set(w1.T)).astype(jnp.bfloat16)           # [KP, 256]
    w2t = w2.T.astype(jnp.bfloat16)                               # [256, 256]
    w3r = w3.astype(jnp.bfloat16)                                 # [1, 256] (row)
    b1r = b1.reshape(1, HIDDEN).astype(jnp.float32)
    b2r = b2.reshape(1, HIDDEN).astype(jnp.float32)
    b3r = b3.reshape(1, 1).astype(jnp.float32)

    grid = (Bp // tb,)
    out = pl.pallas_call(
        _q_kernel,
        out_shape=jax.ShapeDtypeStruct((1, Bp), jnp.float32),
        grid_spec=pltpu.PrefetchScalarGridSpec(
            num_scalar_prefetch=0,
            grid=grid,
            in_specs=[
                pl.BlockSpec((tb, KP), lambda i: (i, 0)),          # x (batch tile)
                pl.BlockSpec((KP, HIDDEN), lambda i: (0, 0)),      # W1 (resident)
                pl.BlockSpec((1, HIDDEN), lambda i: (0, 0)),       # b1
                pl.BlockSpec((HIDDEN, HIDDEN), lambda i: (0, 0)),  # W2 (resident)
                pl.BlockSpec((1, HIDDEN), lambda i: (0, 0)),       # b2
                pl.BlockSpec((1, HIDDEN), lambda i: (0, 0)),       # W3 row
                pl.BlockSpec((1, 1), lambda i: (0, 0)),            # b3
            ],
            out_specs=pl.BlockSpec((1, tb), lambda i: (0, i)),     # lane-dense out
        ),
        compiler_params=pltpu.CompilerParams(
            dimension_semantics=("parallel",)),
    )(x, w1p, b1r, w2t, b2r, w3r, b3r)

    return out[0, :B].reshape(B, OUT_DIM)


def init_q_params(key):
    """Deterministic init matching PyTorch nn.Linear default U(-1/sqrt(fan_in), 1/sqrt(fan_in))."""
    def linear(key, fan_in, fan_out):
        kw, kb = jax.random.split(key)
        bound = 1.0 / jnp.sqrt(jnp.float32(fan_in))
        w = jax.random.uniform(kw, (fan_out, fan_in), jnp.float32, -bound, bound)
        b = jax.random.uniform(kb, (fan_out,), jnp.float32, -bound, bound)
        return w, b

    k1, k2, k3 = jax.random.split(key, 3)
    w1, b1 = linear(k1, IN_DIM, HIDDEN)
    w2, b2 = linear(k2, HIDDEN, HIDDEN)
    w3, b3 = linear(k3, HIDDEN, OUT_DIM)
    return (w1, b1, w2, b2, w3, b3)


def q_reference(s, a, params):
    """Pure-JAX f32 reference mirroring the PyTorch forward exactly."""
    w1, b1, w2, b2, w3, b3 = params
    s = s.reshape(-1, STATE_DIM)
    a = a.reshape(-1, ACTION_DIM)
    x = jnp.concatenate((s, a), axis=-1)
    x = jnp.maximum(x @ w1.T + b1, 0.0)
    x = jnp.maximum(x @ w2.T + b2, 0.0)
    return x @ w3.T + b3


if __name__ == "__main__":
    key = jax.random.PRNGKey(0)
    k_params, k_s1, k_a1, k_s2, k_a2 = jax.random.split(key, 5)

    params = init_q_params(k_params)

    # Small batch (single grid step).
    batch = 2
    s = jax.random.normal(k_s1, (batch, STATE_DIM), jnp.float32)
    a = jax.random.normal(k_a1, (batch, ACTION_DIM), jnp.float32)
    out = jax.block_until_ready(q_forward(s, a, params))
    ref = q_reference(s, a, params)
    assert out.shape == (batch, OUT_DIM), out.shape
    assert jnp.allclose(out, ref, atol=2e-2, rtol=2e-2), (out, ref)

    # Larger batch with a small tile to exercise multiple grid steps + padding.
    batch2 = 600
    s2 = jax.random.normal(k_s2, (batch2, STATE_DIM), jnp.float32)
    a2 = jax.random.normal(k_a2, (batch2, ACTION_DIM), jnp.float32)
    out2 = jax.block_until_ready(q_forward(s2, a2, params, tb=256))
    ref2 = q_reference(s2, a2, params)
    assert out2.shape == (batch2, OUT_DIM), out2.shape
    assert jnp.allclose(out2, ref2, atol=2e-2, rtol=2e-2), (out2, ref2)

    print("KERNEL_OK")
</pallas_src>

<mosaic_0001>
module attributes {stable_mosaic.version = 11 : i64} {
  func.func @_q_kernel(%arg0: i32, %arg1: memref<256x32xbf16, #tpu.memory_space<vmem>>, %arg2: memref<32x256xbf16, #tpu.memory_space<vmem>>, %arg3: memref<1x256xf32, #tpu.memory_space<vmem>>, %arg4: memref<256x256xbf16, #tpu.memory_space<vmem>>, %arg5: memref<1x256xf32, #tpu.memory_space<vmem>>, %arg6: memref<1x256xbf16, #tpu.memory_space<vmem>>, %arg7: memref<1x1xf32, #tpu.memory_space<vmem>>, %arg8: memref<1x256xf32, #tpu.memory_space<vmem>>) attributes {dimension_semantics = [#tpu.dimension_semantics<parallel>], iteration_bounds = array<i64: 1>, scalar_prefetch = 0 : i64, scratch_operands = 0 : i64, tpu.core_type = #tpu.core_type<tc>, window_params = [{transform_indices = @transform_0, window_bounds = array<i64: 256, 32>}, {pipeline_mode = #tpu.pipeline_mode<synchronous>, transform_indices = @transform_1, window_bounds = array<i64: 32, 256>}, {pipeline_mode = #tpu.pipeline_mode<synchronous>, transform_indices = @transform_2, window_bounds = array<i64: 1, 256>}, {pipeline_mode = #tpu.pipeline_mode<synchronous>, transform_indices = @transform_3, window_bounds = array<i64: 256, 256>}, {pipeline_mode = #tpu.pipeline_mode<synchronous>, transform_indices = @transform_4, window_bounds = array<i64: 1, 256>}, {pipeline_mode = #tpu.pipeline_mode<synchronous>, transform_indices = @transform_5, window_bounds = array<i64: 1, 256>}, {pipeline_mode = #tpu.pipeline_mode<synchronous>, transform_indices = @transform_6, window_bounds = array<i64: 1, 1>}, {transform_indices = @transform_7, window_bounds = array<i64: 1, 256>}]} {
    %c0 = arith.constant 0 : index
    %c0_0 = arith.constant 0 : index
    %0 = vector.load %arg1[%c0, %c0_0] : memref<256x32xbf16, #tpu.memory_space<vmem>>, vector<256x32xbf16>
    %c0_1 = arith.constant 0 : index
    %c0_2 = arith.constant 0 : index
    %1 = vector.load %arg2[%c0_1, %c0_2] : memref<32x256xbf16, #tpu.memory_space<vmem>>, vector<32x256xbf16>
    %cst = arith.constant dense<0.000000e+00> : vector<256x256xf32>
    %2 = tpu.matmul %0, %1, %cst {dimension_numbers = #tpu.dot_dimension_numbers<[1], [0], [0], [1], [0, 0, 1, 1], [], []>} : vector<256x32xbf16>, vector<32x256xbf16>, vector<256x256xf32> -> vector<256x256xf32>
    %c0_3 = arith.constant 0 : index
    %c0_4 = arith.constant 0 : index
    %3 = vector.load %arg3[%c0_3, %c0_4] : memref<1x256xf32, #tpu.memory_space<vmem>>, vector<1x256xf32>
    %4 = vector.broadcast %3 : vector<1x256xf32> to vector<256x256xf32>
    %5 = arith.addf %2, %4 : vector<256x256xf32>
    %cst_5 = arith.constant 0.000000e+00 : f32
    %6 = vector.broadcast %cst_5 : f32 to vector<256x256xf32>
    %7 = arith.maximumf %5, %6 : vector<256x256xf32>
    %8 = arith.truncf %7 : vector<256x256xf32> to vector<256x256xbf16>
    %c0_6 = arith.constant 0 : index
    %c0_7 = arith.constant 0 : index
    %9 = vector.load %arg4[%c0_6, %c0_7] : memref<256x256xbf16, #tpu.memory_space<vmem>>, vector<256x256xbf16>
    %cst_8 = arith.constant dense<0.000000e+00> : vector<256x256xf32>
    %10 = tpu.matmul %8, %9, %cst_8 {dimension_numbers = #tpu.dot_dimension_numbers<[1], [0], [0], [1], [0, 0, 1, 1], [], []>} : vector<256x256xbf16>, vector<256x256xbf16>, vector<256x256xf32> -> vector<256x256xf32>
    %c0_9 = arith.constant 0 : index
    %c0_10 = arith.constant 0 : index
    %11 = vector.load %arg5[%c0_9, %c0_10] : memref<1x256xf32, #tpu.memory_space<vmem>>, vector<1x256xf32>
    %12 = vector.broadcast %11 : vector<1x256xf32> to vector<256x256xf32>
    %13 = arith.addf %10, %12 : vector<256x256xf32>
    %cst_11 = arith.constant 0.000000e+00 : f32
    %14 = vector.broadcast %cst_11 : f32 to vector<256x256xf32>
    %15 = arith.maximumf %13, %14 : vector<256x256xf32>
    %16 = arith.truncf %15 : vector<256x256xf32> to vector<256x256xbf16>
    %c0_12 = arith.constant 0 : index
    %c0_13 = arith.constant 0 : index
    %17 = vector.load %arg6[%c0_12, %c0_13] : memref<1x256xbf16, #tpu.memory_space<vmem>>, vector<1x256xbf16>
    %18 = tpu.transpose %16, [1, 0] : vector<256x256xbf16> -> vector<256x256xbf16>
    %cst_14 = arith.constant dense<0.000000e+00> : vector<1x256xf32>
    %19 = tpu.matmul %17, %18, %cst_14 {dimension_numbers = #tpu.dot_dimension_numbers<[1], [0], [0], [1], [0, 0, 1, 1], [], []>} : vector<1x256xbf16>, vector<256x256xbf16>, vector<1x256xf32> -> vector<1x256xf32>
    %c0_15 = arith.constant 0 : index
    %c0_16 = arith.constant 0 : index
    %20 = vector.load %arg7[%c0_15, %c0_16] : memref<1x1xf32, #tpu.memory_space<vmem>>, vector<1x1xf32>
    %21 = vector.broadcast %20 : vector<1x1xf32> to vector<1x256xf32>
    %22 = arith.addf %19, %21 : vector<1x256xf32>
    %c0_17 = arith.constant 0 : index
    %c0_18 = arith.constant 0 : index
    %23 = vector.load %arg8[%c0_17, %c0_18] : memref<1x256xf32, #tpu.memory_space<vmem>>, vector<1x256xf32>
    tpu.vector_store %arg8[%c0_17, %c0_18], %22 {strides = array<i32>} : memref<1x256xf32, #tpu.memory_space<vmem>>, vector<1x256xf32>,
    return
  }
  func.func @transform_0(%arg0: i32) -> (i32, i32) {
    %c0_i32 = arith.constant 0 : i32
    %c0_i32_0 = arith.constant 0 : i32
    return %arg0, %c0_i32 : i32, i32
  }
  func.func @transform_1(%arg0: i32) -> (i32, i32) {
    %c0_i32 = arith.constant 0 : i32
    %c0_i32_0 = arith.constant 0 : i32
    %c0_i32_1 = arith.constant 0 : i32
    return %c0_i32, %c0_i32_0 : i32, i32
  }
  func.func @transform_2(%arg0: i32) -> (i32, i32) {
    %c0_i32 = arith.constant 0 : i32
    %c0_i32_0 = arith.constant 0 : i32
    %c0_i32_1 = arith.constant 0 : i32
    return %c0_i32, %c0_i32_0 : i32, i32
  }
  func.func @transform_3(%arg0: i32) -> (i32, i32) {
    %c0_i32 = arith.constant 0 : i32
    %c0_i32_0 = arith.constant 0 : i32
    %c0_i32_1 = arith.constant 0 : i32
    return %c0_i32, %c0_i32_0 : i32, i32
  }
  func.func @transform_4(%arg0: i32) -> (i32, i32) {
    %c0_i32 = arith.constant 0 : i32
    %c0_i32_0 = arith.constant 0 : i32
    %c0_i32_1 = arith.constant 0 : i32
    return %c0_i32, %c0_i32_0 : i32, i32
  }
  func.func @transform_5(%arg0: i32) -> (i32, i32) {
    %c0_i32 = arith.constant 0 : i32
    %c0_i32_0 = arith.constant 0 : i32
    %c0_i32_1 = arith.constant 0 : i32
    return %c0_i32, %c0_i32_0 : i32, i32
  }
  func.func @transform_6(%arg0: i32) -> (i32, i32) {
    %c0_i32 = arith.constant 0 : i32
    %c0_i32_0 = arith.constant 0 : i32
    %c0_i32_1 = arith.constant 0 : i32
    return %c0_i32, %c0_i32_0 : i32, i32
  }
  func.func @transform_7(%arg0: i32) -> (i32, i32) {
    %c0_i32 = arith.constant 0 : i32
    %c0_i32_0 = arith.constant 0 : i32
    return %c0_i32, %arg0 : i32, i32
  }
}

</mosaic_0001>

<llo_original>
// kernel: tpu_custom_call.1
$region0: #{tpu_custom_call.1}
  #allocation0 [shape = 'u32[]', space=smem, size = 0x4, offset = 0x4, fixed_abs, tag = 'smem constant byte address 0x4 - core index']
  #allocation1 [shape = 'u32[72,128]{1,0:T(1,128)}', space=vmem, size = 0x9000, scoped, tag = 'internal scratch']
  #allocation2 [shape = 'f32[1,1]{1,0:T(1,128)S(1)}', space=vmem, size = 0x200, scoped, tag = 'scoped memory for tpu_custom_call.1']
  %s0 = inlined_call_operand.vmem [shape: bf16[256,32], index: 0, kind: input, shape index: {}]
  %s1 = inlined_call_operand.vmem [shape: bf16[32,256], index: 1, kind: input, shape index: {}]
  %s2 = inlined_call_operand.vmem [shape: f32[1,256], index: 2, kind: input, shape index: {}]
  %s3 = inlined_call_operand.hbm [shape: bf16[256,256], index: 3, kind: input, shape index: {}]
  %s4 = inlined_call_operand.vmem [shape: f32[1,256], index: 4, kind: input, shape index: {}]
  %s5 = inlined_call_operand.vmem [shape: bf16[1,256], index: 5, kind: input, shape index: {}]
  %s6 = inlined_call_operand.<no memory space> [shape: f32[1,1], index: 6, kind: input, shape index: {}]
  %s7 = inlined_call_operand.hbm [shape: f32[1,256], index: 7, kind: output, shape index: {}]
  %s8 = sld [smem:[#allocation0]]
  $region42: #{tpu_custom_call.1} parent=0
    _
  %s10 = ssub.s32 1, %s8
  %s11 = scalar_select 0, %s10, %s8
  %v12 = vstv %s6
  %13 = vst [vmem:[#allocation2] sm:$0x1] %v12
  $region1: #{tpu_custom_call.1} parent=0
    #allocation3 [shape = 'u8[131072]{0}', space=vmem, size = 0x20000, scoped, tag = 'input window, operand 3, single buffered']
    #allocation4 [shape = 's32[1]{0}', space=sflag, size = 0x4, scoped, tag = 'scoped memory for tpu_custom_call.1']
    #allocation5 [shape = 's32[1]{0}', space=sflag, size = 0x4, scoped, tag = 'scoped memory for tpu_custom_call.1']
    #allocation6 [shape = 'u8[1024]{0}', space=vmem, size = 0x400, scoped, tag = 'output window, operand 0, single buffered']
    %14 = vsyncpa [#allocation4], 0
    %15 = vsyncpa [#allocation5], 0
    // Predicated region
    $region2: #{tpu_custom_call.1} parent=1 // pred_check
      _
    $region3: #{tpu_custom_call.1} parent=1 // pred_check_branch
      %17 = sbr.rel (0) target = $region5
    $region4: #{tpu_custom_call.1} parent=1 // pred_region
      _
    $region5: #{tpu_custom_call.1} parent=1 // pred_fallthru
      _
    // Predicated region
    $region6: #{tpu_custom_call.1} parent=1 // pred_check
      _
    $region7: #{tpu_custom_call.1} parent=1 // pred_check_branch
      %19 = sbr.rel (0) target = $region9
    $region8: #{tpu_custom_call.1} parent=1 // pred_region
      _
    $region9: #{tpu_custom_call.1} parent=1 // pred_fallthru
      _
    // Predicated region
    $region10: #{tpu_custom_call.1} parent=1 // pred_check
      _
    $region11: #{tpu_custom_call.1} parent=1 // pred_check_branch
      %21 = sbr.rel (0) target = $region13
    $region12: #{tpu_custom_call.1} parent=1 // pred_region
      _
    $region13: #{tpu_custom_call.1} parent=1 // pred_fallthru
      _
    // Predicated region
    $region14: #{tpu_custom_call.1} parent=1 // pred_check
      _
    $region15: #{tpu_custom_call.1} parent=1 // pred_check_branch
      %23 = sbr.rel (0) target = $region17
    $region16: #{tpu_custom_call.1} parent=1 // pred_region
      %25 = vsyncadd [#allocation4], 0
      %s26 = sshll.u32 %s3, 4
      %s27 = int_to_ptr.hbm [resolvable:$true] %s26
      %s28 = sshll.u32 [#allocation3], 4
      %s29 = int_to_ptr.vmem [resolvable:$true] %s28
      %34 = dma.hbm_to_vmem [thread:$0]  %s27, 4096, %s29, [#allocation4], 128, 128, 8
    $region17: #{tpu_custom_call.1} parent=1 // pred_fallthru
      _
    // Predicated region
    $region18: #{tpu_custom_call.1} parent=1 // pred_check
      _
    $region19: #{tpu_custom_call.1} parent=1 // pred_check_branch
      %36 = sbr.rel (0) target = $region21
    $region20: #{tpu_custom_call.1} parent=1 // pred_region
      _
    $region21: #{tpu_custom_call.1} parent=1 // pred_fallthru
      _
    // Predicated region
    $region22: #{tpu_custom_call.1} parent=1 // pred_check
      _
    $region23: #{tpu_custom_call.1} parent=1 // pred_check_branch
      %38 = sbr.rel (0) target = $region25
    $region24: #{tpu_custom_call.1} parent=1 // pred_region
      _
    $region25: #{tpu_custom_call.1} parent=1 // pred_fallthru
      _
    // Predicated region
    $region26: #{tpu_custom_call.1} parent=1 // pred_check
      _
    $region27: #{tpu_custom_call.1} parent=1 // pred_check_branch
      %40 = sbr.rel (0) target = $region29
    $region28: #{tpu_custom_call.1} parent=1 // pred_region
      _
    $region29: #{tpu_custom_call.1} parent=1 // pred_fallthru
      _
    // Predicated region
    $region30: #{tpu_custom_call.1} parent=1 // pred_check
      _
    $region31: #{tpu_custom_call.1} parent=1 // pred_check_branch
      %42 = sbr.rel (0) target = $region33
    $region32: #{tpu_custom_call.1} parent=1 // pred_region
      %44 = dma.done [#allocation4], 4096
    $region33: #{tpu_custom_call.1} parent=1 // pred_fallthru
      _
    %v46 = vld [vmem:[%s0] sm:$0xf]
    %v47 = vld [vmem:[%s0 + $0x4] sm:$0xf]
    %v48 = vld [vmem:[%s0 + $0x8] sm:$0xf]
    %v49 = vld [vmem:[%s0 + $0xc] sm:$0xf]
    %v50 = vld [vmem:[%s0 + $0x10] sm:$0xf]
    %v51 = vld [vmem:[%s0 + $0x14] sm:$0xf]
    %v52 = vld [vmem:[%s0 + $0x18] sm:$0xf]
    %v53 = vld [vmem:[%s0 + $0x1c] sm:$0xf]
    %v54 = vld [vmem:[%s0 + $0x20] sm:$0xf]
    %v55 = vld [vmem:[%s0 + $0x24] sm:$0xf]
    %v56 = vld [vmem:[%s0 + $0x28] sm:$0xf]
    %v57 = vld [vmem:[%s0 + $0x2c] sm:$0xf]
    %v58 = vld [vmem:[%s0 + $0x30] sm:$0xf]
    %v59 = vld [vmem:[%s0 + $0x34] sm:$0xf]
    %v60 = vld [vmem:[%s0 + $0x38] sm:$0xf]
    %v61 = vld [vmem:[%s0 + $0x3c] sm:$0xf]
    %v62 = vld [vmem:[%s0 + $0x40] sm:$0xf]
    %v63 = vld [vmem:[%s0 + $0x44] sm:$0xf]
    %v64 = vld [vmem:[%s0 + $0x48] sm:$0xf]
    %v65 = vld [vmem:[%s0 + $0x4c] sm:$0xf]
    %v66 = vld [vmem:[%s0 + $0x50] sm:$0xf]
    %v67 = vld [vmem:[%s0 + $0x54] sm:$0xf]
    %v68 = vld [vmem:[%s0 + $0x58] sm:$0xf]
    %v69 = vld [vmem:[%s0 + $0x5c] sm:$0xf]
    %v70 = vld [vmem:[%s0 + $0x60] sm:$0xf]
    %v71 = vld [vmem:[%s0 + $0x64] sm:$0xf]
    %v72 = vld [vmem:[%s0 + $0x68] sm:$0xf]
    %v73 = vld [vmem:[%s0 + $0x6c] sm:$0xf]
    %v74 = vld [vmem:[%s0 + $0x70] sm:$0xf]
    %v75 = vld [vmem:[%s0 + $0x74] sm:$0xf]
    %v76 = vld [vmem:[%s0 + $0x78] sm:$0xf]
    %v77 = vld [vmem:[%s0 + $0x7c] sm:$0xf]
    %v78 = vld [vmem:[%s1] sm:$0xff]
    %v79 = vld [vmem:[%s1 + $0x8] sm:$0xff]
    %v80 = vld [vmem:[%s1 + $0x10] sm:$0xff]
    %v81 = vld [vmem:[%s1 + $0x18] sm:$0xff]
    %v82 = vld [vmem:[%s2] sm:$0x3]
    %v84 = vperm.slane %v82, 0
    %v85 = vperm.slane %v82, 1
    %v120 = vunpack.c.l.b16 %v46
    %v121 = vunpack.c.l.b16 %v47
    %v122 = vunpack.c.l.b16 %v48
    %v123 = vunpack.c.l.b16 %v49
    %v124 = vunpack.c.l.b16 %v50
    %v125 = vunpack.c.l.b16 %v51
    %v126 = vunpack.c.l.b16 %v52
    %v127 = vunpack.c.l.b16 %v53
    %v128 = vunpack.c.l.b16 %v54
    %v129 = vunpack.c.l.b16 %v55
    %v130 = vunpack.c.l.b16 %v56
    %v131 = vunpack.c.l.b16 %v57
    %v132 = vunpack.c.l.b16 %v58
    %v133 = vunpack.c.l.b16 %v59
    %v134 = vunpack.c.l.b16 %v60
    %v135 = vunpack.c.l.b16 %v61
    %v136 = vunpack.c.l.b16 %v62
    %v137 = vunpack.c.l.b16 %v63
    %v138 = vunpack.c.l.b16 %v64
    %v139 = vunpack.c.l.b16 %v65
    %v140 = vunpack.c.l.b16 %v66
    %v141 = vunpack.c.l.b16 %v67
    %v142 = vunpack.c.l.b16 %v68
    %v143 = vunpack.c.l.b16 %v69
    %v144 = vunpack.c.l.b16 %v70
    %v145 = vunpack.c.l.b16 %v71
    %v146 = vunpack.c.l.b16 %v72
    %v147 = vunpack.c.l.b16 %v73
    %v148 = vunpack.c.l.b16 %v74
    %v149 = vunpack.c.l.b16 %v75
    %v150 = vunpack.c.l.b16 %v76
    %v151 = vunpack.c.l.b16 %v77
    %v152 = vpack.c.b16 %v121, %v120
    %v153 = vpack.c.b16 %v123, %v122
    %v154 = vpack.c.b16 %v125, %v124
    %v155 = vpack.c.b16 %v127, %v126
    %v156 = vpack.c.b16 %v129, %v128
    %v157 = vpack.c.b16 %v131, %v130
    %v158 = vpack.c.b16 %v133, %v132
    %v159 = vpack.c.b16 %v135, %v134
    %v160 = vpack.c.b16 %v137, %v136
    %v161 = vpack.c.b16 %v139, %v138
    %v162 = vpack.c.b16 %v141, %v140
    %v163 = vpack.c.b16 %v143, %v142
    %v164 = vpack.c.b16 %v145, %v144
    %v165 = vpack.c.b16 %v147, %v146
    %v166 = vpack.c.b16 %v149, %v148
    %v167 = vpack.c.b16 %v151, %v150
    %v172 = vunpack.c.l.b16 %v78
    %v173 = vunpack.c.h.b16 %v78
    %v174 = vunpack.c.l.b16 %v79
    %v175 = vunpack.c.h.b16 %v79
    %v176 = vunpack.c.l.b16 %v80
    %v177 = vunpack.c.h.b16 %v80
    %v178 = vunpack.c.l.b16 %v81
    %v179 = vunpack.c.h.b16 %v81
    %v180 = vpack.c.b16 %v174, %v172
    %v181 = vpack.c.b16 %v175, %v173
    %v182 = vpack.c.b16 %v178, %v176
    %v183 = vpack.c.b16 %v179, %v177
    %vm188 = vcmask 261120
    %v190 = vsel %vm188, %v152, 0
    %v193 = vsel %vm188, %v153, 0
    %v196 = vsel %vm188, %v154, 0
    %v199 = vsel %vm188, %v155, 0
    %v202 = vsel %vm188, %v156, 0
    %v205 = vsel %vm188, %v157, 0
    %v208 = vsel %vm188, %v158, 0
    %v211 = vsel %vm188, %v159, 0
    %v214 = vsel %vm188, %v160, 0
    %v217 = vsel %vm188, %v161, 0
    %v220 = vsel %vm188, %v162, 0
    %v223 = vsel %vm188, %v163, 0
    %v226 = vsel %vm188, %v164, 0
    %v229 = vsel %vm188, %v165, 0
    %v232 = vsel %vm188, %v166, 0
    %v235 = vsel %vm188, %v167, 0
    %237 = vmatpush.bf16.msra.mxu0 0
    %238 = vmatpush.bf16.msra.mxu0 0
    %239 = vmatpush.bf16.msra.mxu0 0
    %240 = vmatpush.bf16.msra.mxu0 0
    %241 = vmatpush.bf16.msra.mxu0 0
    %242 = vmatpush.bf16.msra.mxu0 0
    %243 = vmatpush.bf16.msra.mxu0 %v182
    %244 = vmatpush.bf16.msra.mxu0 %v180
    %245 = vmatmul.bf16.gmra.mxu0 %v190
    %v246 = vpop.f32.mrf.mxu0
    %v247 = vadd.f32 %v84, %v246
    %v248 = vpop.f32.mrf.mxu0
    %v249 = vadd.f32 %v84, %v248
    %250 = vmatmul.bf16.gmra.mxu0 %v193
    %v251 = vpop.f32.mrf.mxu0
    %v252 = vadd.f32 %v84, %v251
    %v253 = vpop.f32.mrf.mxu0
    %v254 = vadd.f32 %v84, %v253
    %255 = vmatmul.bf16.gmra.mxu0 %v196
    %v256 = vpop.f32.mrf.mxu0
    %v257 = vadd.f32 %v84, %v256
    %v258 = vpop.f32.mrf.mxu0
    %v259 = vadd.f32 %v84, %v258
    %260 = vmatmul.bf16.gmra.mxu0 %v199
    %v261 = vpop.f32.mrf.mxu0
    %v262 = vadd.f32 %v84, %v261
    %v263 = vpop.f32.mrf.mxu0
    %v264 = vadd.f32 %v84, %v263
    %265 = vmatmul.bf16.gmra.mxu0 %v202
    %v266 = vpop.f32.mrf.mxu0
    %v267 = vadd.f32 %v84, %v266
    %v268 = vpop.f32.mrf.mxu0
    %v269 = vadd.f32 %v84, %v268
    %270 = vmatmul.bf16.gmra.mxu0 %v205
    %v271 = vpop.f32.mrf.mxu0
    %v272 = vadd.f32 %v84, %v271
    %v273 = vpop.f32.mrf.mxu0
    %v274 = vadd.f32 %v84, %v273
    %275 = vmatmul.bf16.gmra.mxu0 %v208
    %v276 = vpop.f32.mrf.mxu0
    %v277 = vadd.f32 %v84, %v276
    %v278 = vpop.f32.mrf.mxu0
    %v279 = vadd.f32 %v84, %v278
    %280 = vmatmul.bf16.gmra.mxu0 %v211
    %v281 = vpop.f32.mrf.mxu0
    %v282 = vadd.f32 %v84, %v281
    %v283 = vpop.f32.mrf.mxu0
    %v284 = vadd.f32 %v84, %v283
    %285 = vmatmul.bf16.gmra.mxu0 %v214
    %v286 = vpop.f32.mrf.mxu0
    %v287 = vadd.f32 %v84, %v286
    %v288 = vpop.f32.mrf.mxu0
    %v289 = vadd.f32 %v84, %v288
    %290 = vmatmul.bf16.gmra.mxu0 %v217
    %v291 = vpop.f32.mrf.mxu0
    %v292 = vadd.f32 %v84, %v291
    %v293 = vpop.f32.mrf.mxu0
    %v294 = vadd.f32 %v84, %v293
    %295 = vmatmul.bf16.gmra.mxu0 %v220
    %v296 = vpop.f32.mrf.mxu0
    %v297 = vadd.f32 %v84, %v296
    %v298 = vpop.f32.mrf.mxu0
    %v299 = vadd.f32 %v84, %v298
    %300 = vmatmul.bf16.gmra.mxu0 %v223
    %v301 = vpop.f32.mrf.mxu0
    %v302 = vadd.f32 %v84, %v301
    %v303 = vpop.f32.mrf.mxu0
    %v304 = vadd.f32 %v84, %v303
    %305 = vmatmul.bf16.gmra.mxu0 %v226
    %v306 = vpop.f32.mrf.mxu0
    %v307 = vadd.f32 %v84, %v306
    %v308 = vpop.f32.mrf.mxu0
    %v309 = vadd.f32 %v84, %v308
    %310 = vmatmul.bf16.gmra.mxu0 %v229
    %v311 = vpop.f32.mrf.mxu0
    %v312 = vadd.f32 %v84, %v311
    %v313 = vpop.f32.mrf.mxu0
    %v314 = vadd.f32 %v84, %v313
    %315 = vmatmul.bf16.gmra.mxu0 %v232
    %v316 = vpop.f32.mrf.mxu0
    %v317 = vadd.f32 %v84, %v316
    %v318 = vpop.f32.mrf.mxu0
    %v319 = vadd.f32 %v84, %v318
    %320 = vmatmul.bf16.gmra.mxu0 %v235
    %v321 = vpop.f32.mrf.mxu0
    %v322 = vadd.f32 %v84, %v321
    %v323 = vpop.f32.mrf.mxu0
    %v324 = vadd.f32 %v84, %v323
    %325 = vdwg.mxu0
    %326 = vmatpush.bf16.msra.mxu0 0
    %327 = vmatpush.bf16.msra.mxu0 0
    %328 = vmatpush.bf16.msra.mxu0 0
    %329 = vmatpush.bf16.msra.mxu0 0
    %330 = vmatpush.bf16.msra.mxu0 0
    %331 = vmatpush.bf16.msra.mxu0 0
    %332 = vmatpush.bf16.msra.mxu0 %v183
    %333 = vmatpush.bf16.msra.mxu0 %v181
    %334 = vmatmul.bf16.gmra.mxu0 %v190
    %v335 = vpop.f32.mrf.mxu0
    %v336 = vadd.f32 %v85, %v335
    %v337 = vpop.f32.mrf.mxu0
    %v338 = vadd.f32 %v85, %v337
    %339 = vmatmul.bf16.gmra.mxu0 %v193
    %v340 = vpop.f32.mrf.mxu0
    %v341 = vadd.f32 %v85, %v340
    %v342 = vpop.f32.mrf.mxu0
    %v343 = vadd.f32 %v85, %v342
    %344 = vmatmul.bf16.gmra.mxu0 %v196
    %v345 = vpop.f32.mrf.mxu0
    %v346 = vadd.f32 %v85, %v345
    %v347 = vpop.f32.mrf.mxu0
    %v348 = vadd.f32 %v85, %v347
    %349 = vmatmul.bf16.gmra.mxu0 %v199
    %v350 = vpop.f32.mrf.mxu0
    %v351 = vadd.f32 %v85, %v350
    %v352 = vpop.f32.mrf.mxu0
    %v353 = vadd.f32 %v85, %v352
    %354 = vmatmul.bf16.gmra.mxu0 %v202
    %v355 = vpop.f32.mrf.mxu0
    %v356 = vadd.f32 %v85, %v355
    %v357 = vpop.f32.mrf.mxu0
    %v358 = vadd.f32 %v85, %v357
    %359 = vmatmul.bf16.gmra.mxu0 %v205
    %v360 = vpop.f32.mrf.mxu0
    %v361 = vadd.f32 %v85, %v360
    %v362 = vpop.f32.mrf.mxu0
    %v363 = vadd.f32 %v85, %v362
    %364 = vmatmul.bf16.gmra.mxu0 %v208
    %v365 = vpop.f32.mrf.mxu0
    %v366 = vadd.f32 %v85, %v365
    %v367 = vpop.f32.mrf.mxu0
    %v368 = vadd.f32 %v85, %v367
    %369 = vmatmul.bf16.gmra.mxu0 %v211
    %v370 = vpop.f32.mrf.mxu0
    %v371 = vadd.f32 %v85, %v370
    %v372 = vpop.f32.mrf.mxu0
    %v373 = vadd.f32 %v85, %v372
    %374 = vmatmul.bf16.gmra.mxu0 %v214
    %v375 = vpop.f32.mrf.mxu0
    %v376 = vadd.f32 %v85, %v375
    %v377 = vpop.f32.mrf.mxu0
    %v378 = vadd.f32 %v85, %v377
    %379 = vmatmul.bf16.gmra.mxu0 %v217
    %v380 = vpop.f32.mrf.mxu0
    %v381 = vadd.f32 %v85, %v380
    %v382 = vpop.f32.mrf.mxu0
    %v383 = vadd.f32 %v85, %v382
    %384 = vmatmul.bf16.gmra.mxu0 %v220
    %v385 = vpop.f32.mrf.mxu0
    %v386 = vadd.f32 %v85, %v385
    %v387 = vpop.f32.mrf.mxu0
    %v388 = vadd.f32 %v85, %v387
    %389 = vmatmul.bf16.gmra.mxu0 %v223
    %v390 = vpop.f32.mrf.mxu0
    %v391 = vadd.f32 %v85, %v390
    %v392 = vpop.f32.mrf.mxu0
    %v393 = vadd.f32 %v85, %v392
    %394 = vmatmul.bf16.gmra.mxu0 %v226
    %v395 = vpop.f32.mrf.mxu0
    %v396 = vadd.f32 %v85, %v395
    %v397 = vpop.f32.mrf.mxu0
    %v398 = vadd.f32 %v85, %v397
    %399 = vmatmul.bf16.gmra.mxu0 %v229
    %v400 = vpop.f32.mrf.mxu0
    %v401 = vadd.f32 %v85, %v400
    %v402 = vpop.f32.mrf.mxu0
    %v403 = vadd.f32 %v85, %v402
    %404 = vmatmul.bf16.gmra.mxu0 %v232
    %v405 = vpop.f32.mrf.mxu0
    %v406 = vadd.f32 %v85, %v405
    %v407 = vpop.f32.mrf.mxu0
    %v408 = vadd.f32 %v85, %v407
    %409 = vmatmul.bf16.gmra.mxu0 %v235
    %v410 = vpop.f32.mrf.mxu0
    %v411 = vadd.f32 %v85, %v410
    %v412 = vpop.f32.mrf.mxu0
    %v413 = vadd.f32 %v85, %v412
    %414 = vdwg.mxu0
    %v415 = vmax.f32 %v247, 0.0
    %v416 = vmax.f32 %v336, 0.0
    %v417 = vmax.f32 %v249, 0.0
    %v418 = vmax.f32 %v338, 0.0
    %v419 = vmax.f32 %v252, 0.0
    %v420 = vmax.f32 %v341, 0.0
    %v421 = vmax.f32 %v254, 0.0
    %v422 = vmax.f32 %v343, 0.0
    %v423 = vmax.f32 %v257, 0.0
    %v424 = vmax.f32 %v346, 0.0
    %v425 = vmax.f32 %v259, 0.0
    %v426 = vmax.f32 %v348, 0.0
    %v427 = vmax.f32 %v262, 0.0
    %v428 = vmax.f32 %v351, 0.0
    %v429 = vmax.f32 %v264, 0.0
    %v430 = vmax.f32 %v353, 0.0
    %v431 = vmax.f32 %v267, 0.0
    %v432 = vmax.f32 %v356, 0.0
    %v433 = vmax.f32 %v269, 0.0
    %v434 = vmax.f32 %v358, 0.0
    %v435 = vmax.f32 %v272, 0.0
    %v436 = vmax.f32 %v361, 0.0
    %v437 = vmax.f32 %v274, 0.0
    %v438 = vmax.f32 %v363, 0.0
    %v439 = vmax.f32 %v277, 0.0
    %v440 = vmax.f32 %v366, 0.0
    %v441 = vmax.f32 %v279, 0.0
    %v442 = vmax.f32 %v368, 0.0
    %v443 = vmax.f32 %v282, 0.0
    %v444 = vmax.f32 %v371, 0.0
    %v445 = vmax.f32 %v284, 0.0
    %v446 = vmax.f32 %v373, 0.0
    %v447 = vmax.f32 %v287, 0.0
    %v448 = vmax.f32 %v376, 0.0
    %v449 = vmax.f32 %v289, 0.0
    %v450 = vmax.f32 %v378, 0.0
    %v451 = vmax.f32 %v292, 0.0
    %v452 = vmax.f32 %v381, 0.0
    %v453 = vmax.f32 %v294, 0.0
    %v454 = vmax.f32 %v383, 0.0
    %v455 = vmax.f32 %v297, 0.0
    %v456 = vmax.f32 %v386, 0.0
    %v457 = vmax.f32 %v299, 0.0
    %v458 = vmax.f32 %v388, 0.0
    %v459 = vmax.f32 %v302, 0.0
    %v460 = vmax.f32 %v391, 0.0
    %v461 = vmax.f32 %v304, 0.0
    %v462 = vmax.f32 %v393, 0.0
    %v463 = vmax.f32 %v307, 0.0
    %v464 = vmax.f32 %v396, 0.0
    %v465 = vmax.f32 %v309, 0.0
    %v466 = vmax.f32 %v398, 0.0
    %v467 = vmax.f32 %v312, 0.0
    %v468 = vmax.f32 %v401, 0.0
    %v469 = vmax.f32 %v314, 0.0
    %v470 = vmax.f32 %v403, 0.0
    %v471 = vmax.f32 %v317, 0.0
    %v472 = vmax.f32 %v406, 0.0
    %v473 = vmax.f32 %v319, 0.0
    %v474 = vmax.f32 %v408, 0.0
    %v475 = vmax.f32 %v322, 0.0
    %v476 = vmax.f32 %v411, 0.0
    %v477 = vmax.f32 %v324, 0.0
    %v478 = vmax.f32 %v413, 0.0
    %v479 = vpack.c.bf16 %v417, %v415
    %v480 = vpack.c.bf16 %v418, %v416
    %v481 = vpack.c.bf16 %v421, %v419
    %v482 = vpack.c.bf16 %v422, %v420
    %v483 = vpack.c.bf16 %v425, %v423
    %v484 = vpack.c.bf16 %v426, %v424
    %v485 = vpack.c.bf16 %v429, %v427
    %v486 = vpack.c.bf16 %v430, %v428
    %v487 = vpack.c.bf16 %v433, %v431
    %v488 = vpack.c.bf16 %v434, %v432
    %v489 = vpack.c.bf16 %v437, %v435
    %v490 = vpack.c.bf16 %v438, %v436
    %v491 = vpack.c.bf16 %v441, %v439
    %v492 = vpack.c.bf16 %v442, %v440
    %v493 = vpack.c.bf16 %v445, %v443
    %v494 = vpack.c.bf16 %v446, %v444
    %v495 = vpack.c.bf16 %v449, %v447
    %v496 = vpack.c.bf16 %v450, %v448
    %v497 = vpack.c.bf16 %v453, %v451
    %v498 = vpack.c.bf16 %v454, %v452
    %v499 = vpack.c.bf16 %v457, %v455
    %v500 = vpack.c.bf16 %v458, %v456
    %v501 = vpack.c.bf16 %v461, %v459
    %v502 = vpack.c.bf16 %v462, %v460
    %v503 = vpack.c.bf16 %v465, %v463
    %v504 = vpack.c.bf16 %v466, %v464
    %v505 = vpack.c.bf16 %v469, %v467
    %v506 = vpack.c.bf16 %v470, %v468
    %v507 = vpack.c.bf16 %v473, %v471
    %v508 = vpack.c.bf16 %v474, %v472
    %v509 = vpack.c.bf16 %v477, %v475
    %v510 = vpack.c.bf16 %v478, %v476
    %v511 = vld [vmem:[#allocation3] sm:$0xff]
    %v512 = vld [vmem:[#allocation3 + $0x8] sm:$0xff]
    %v513 = vld [vmem:[#allocation3 + $0x10] sm:$0xff]
    %v514 = vld [vmem:[#allocation3 + $0x18] sm:$0xff]
    %v515 = vld [vmem:[#allocation3 + $0x20] sm:$0xff]
    %v516 = vld [vmem:[#allocation3 + $0x28] sm:$0xff]
    %v517 = vld [vmem:[#allocation3 + $0x30] sm:$0xff]
    %v518 = vld [vmem:[#allocation3 + $0x38] sm:$0xff]
    %v519 = vld [vmem:[#allocation3 + $0x40] sm:$0xff]
    %v520 = vld [vmem:[#allocation3 + $0x48] sm:$0xff]
    %v521 = vld [vmem:[#allocation3 + $0x50] sm:$0xff]
    %v522 = vld [vmem:[#allocation3 + $0x58] sm:$0xff]
    %v523 = vld [vmem:[#allocation3 + $0x60] sm:$0xff]
    %v524 = vld [vmem:[#allocation3 + $0x68] sm:$0xff]
    %v525 = vld [vmem:[#allocation3 + $0x70] sm:$0xff]
    %v526 = vld [vmem:[#allocation3 + $0x78] sm:$0xff]
    %v527 = vld [vmem:[#allocation3 + $0x80] sm:$0xff]
    %v528 = vld [vmem:[#allocation3 + $0x88] sm:$0xff]
    %v529 = vld [vmem:[#allocation3 + $0x90] sm:$0xff]
    %v530 = vld [vmem:[#allocation3 + $0x98] sm:$0xff]
    %v531 = vld [vmem:[#allocation3 + $0xa0] sm:$0xff]
    %v532 = vld [vmem:[#allocation3 + $0xa8] sm:$0xff]
    %v533 = vld [vmem:[#allocation3 + $0xb0] sm:$0xff]
    %v534 = vld [vmem:[#allocation3 + $0xb8] sm:$0xff]
    %v535 = vld [vmem:[#allocation3 + $0xc0] sm:$0xff]
    %v536 = vld [vmem:[#allocation3 + $0xc8] sm:$0xff]
    %v537 = vld [vmem:[#allocation3 + $0xd0] sm:$0xff]
    %v538 = vld [vmem:[#allocation3 + $0xd8] sm:$0xff]
    %v539 = vld [vmem:[#allocation3 + $0xe0] sm:$0xff]
    %v540 = vld [vmem:[#allocation3 + $0xe8] sm:$0xff]
    %v541 = vld [vmem:[#allocation3 + $0xf0] sm:$0xff]
    %v542 = vld [vmem:[#allocation3 + $0xf8] sm:$0xff]
    %v543 = vld [vmem:[%s4] sm:$0x3]
    %v545 = vperm.slane %v543, 0
    %v546 = vperm.slane %v543, 1
    %v581 = vunpack.c.l.b16 %v511
    %v582 = vunpack.c.h.b16 %v511
    %v583 = vunpack.c.l.b16 %v512
    %v584 = vunpack.c.h.b16 %v512
    %v585 = vunpack.c.l.b16 %v513
    %v586 = vunpack.c.h.b16 %v513
    %v587 = vunpack.c.l.b16 %v514
    %v588 = vunpack.c.h.b16 %v514
    %v589 = vunpack.c.l.b16 %v515
    %v590 = vunpack.c.h.b16 %v515
    %v591 = vunpack.c.l.b16 %v516
    %v592 = vunpack.c.h.b16 %v516
    %v593 = vunpack.c.l.b16 %v517
    %v594 = vunpack.c.h.b16 %v517
    %v595 = vunpack.c.l.b16 %v518
    %v596 = vunpack.c.h.b16 %v518
    %v597 = vunpack.c.l.b16 %v519
    %v598 = vunpack.c.h.b16 %v519
    %v599 = vunpack.c.l.b16 %v520
    %v600 = vunpack.c.h.b16 %v520
    %v601 = vunpack.c.l.b16 %v521
    %v602 = vunpack.c.h.b16 %v521
    %v603 = vunpack.c.l.b16 %v522
    %v604 = vunpack.c.h.b16 %v522
    %v605 = vunpack.c.l.b16 %v523
    %v606 = vunpack.c.h.b16 %v523
    %v607 = vunpack.c.l.b16 %v524
    %v608 = vunpack.c.h.b16 %v524
    %v609 = vunpack.c.l.b16 %v525
    %v610 = vunpack.c.h.b16 %v525
    %v611 = vunpack.c.l.b16 %v526
    %v612 = vunpack.c.h.b16 %v526
    %v613 = vunpack.c.l.b16 %v527
    %v614 = vunpack.c.h.b16 %v527
    %v615 = vunpack.c.l.b16 %v528
    %v616 = vunpack.c.h.b16 %v528
    %v617 = vunpack.c.l.b16 %v529
    %v618 = vunpack.c.h.b16 %v529
    %v619 = vunpack.c.l.b16 %v530
    %v620 = vunpack.c.h.b16 %v530
    %v621 = vunpack.c.l.b16 %v531
    %v622 = vunpack.c.h.b16 %v531
    %v623 = vunpack.c.l.b16 %v532
    %v624 = vunpack.c.h.b16 %v532
    %v625 = vunpack.c.l.b16 %v533
    %v626 = vunpack.c.h.b16 %v533
    %v627 = vunpack.c.l.b16 %v534
    %v628 = vunpack.c.h.b16 %v534
    %v629 = vunpack.c.l.b16 %v535
    %v630 = vunpack.c.h.b16 %v535
    %v631 = vunpack.c.l.b16 %v536
    %v632 = vunpack.c.h.b16 %v536
    %v633 = vunpack.c.l.b16 %v537
    %v634 = vunpack.c.h.b16 %v537
    %v635 = vunpack.c.l.b16 %v538
    %v636 = vunpack.c.h.b16 %v538
    %v637 = vunpack.c.l.b16 %v539
    %v638 = vunpack.c.h.b16 %v539
    %v639 = vunpack.c.l.b16 %v540
    %v640 = vunpack.c.h.b16 %v540
    %v641 = vunpack.c.l.b16 %v541
    %v642 = vunpack.c.h.b16 %v541
    %v643 = vunpack.c.l.b16 %v542
    %v644 = vunpack.c.h.b16 %v542
    %v645 = vpack.c.b16 %v583, %v581
    %v646 = vpack.c.b16 %v584, %v582
    %v647 = vpack.c.b16 %v587, %v585
    %v648 = vpack.c.b16 %v588, %v586
    %v649 = vpack.c.b16 %v591, %v589
    %v650 = vpack.c.b16 %v592, %v590
    %v651 = vpack.c.b16 %v595, %v593
    %v652 = vpack.c.b16 %v596, %v594
    %v653 = vpack.c.b16 %v599, %v597
    %v654 = vpack.c.b16 %v600, %v598
    %v655 = vpack.c.b16 %v603, %v601
    %v656 = vpack.c.b16 %v604, %v602
    %v657 = vpack.c.b16 %v607, %v605
    %v658 = vpack.c.b16 %v608, %v606
    %v659 = vpack.c.b16 %v611, %v609
    %v660 = vpack.c.b16 %v612, %v610
    %v661 = vpack.c.b16 %v615, %v613
    %v662 = vpack.c.b16 %v616, %v614
    %v663 = vpack.c.b16 %v619, %v617
    %v664 = vpack.c.b16 %v620, %v618
    %v665 = vpack.c.b16 %v623, %v621
    %v666 = vpack.c.b16 %v624, %v622
    %v667 = vpack.c.b16 %v627, %v625
    %v668 = vpack.c.b16 %v628, %v626
    %v669 = vpack.c.b16 %v631, %v629
    %v670 = vpack.c.b16 %v632, %v630
    %v671 = vpack.c.b16 %v635, %v633
    %v672 = vpack.c.b16 %v636, %v634
    %v673 = vpack.c.b16 %v639, %v637
    %v674 = vpack.c.b16 %v640, %v638
    %v675 = vpack.c.b16 %v643, %v641
    %v676 = vpack.c.b16 %v644, %v642
    %709 = vmatpush.bf16.msra.mxu0 %v659
    %710 = vmatpush.bf16.msra.mxu0 %v657
    %711 = vmatpush.bf16.msra.mxu0 %v655
    %712 = vmatpush.bf16.msra.mxu0 %v653
    %713 = vmatpush.bf16.msra.mxu0 %v651
    %714 = vmatpush.bf16.msra.mxu0 %v649
    %715 = vmatpush.bf16.msra.mxu0 %v647
    %716 = vmatpush.bf16.msra.mxu0 %v645
    %717 = vmatmul.bf16.gmra.mxu0 %v479
    %v718 = vpop.f32.mrf.mxu0
    %v719 = vadd.f32 %v545, %v718
    %v720 = vpop.f32.mrf.mxu0
    %v721 = vadd.f32 %v545, %v720
    %722 = vmatmul.bf16.gmra.mxu0 %v481
    %v723 = vpop.f32.mrf.mxu0
    %v724 = vadd.f32 %v545, %v723
    %v725 = vpop.f32.mrf.mxu0
    %v726 = vadd.f32 %v545, %v725
    %727 = vmatmul.bf16.gmra.mxu0 %v483
    %v728 = vpop.f32.mrf.mxu0
    %v729 = vadd.f32 %v545, %v728
    %v730 = vpop.f32.mrf.mxu0
    %v731 = vadd.f32 %v545, %v730
    %732 = vmatmul.bf16.gmra.mxu0 %v485
    %v733 = vpop.f32.mrf.mxu0
    %v734 = vadd.f32 %v545, %v733
    %v735 = vpop.f32.mrf.mxu0
    %v736 = vadd.f32 %v545, %v735
    %737 = vmatmul.bf16.gmra.mxu0 %v487
    %v738 = vpop.f32.mrf.mxu0
    %v739 = vadd.f32 %v545, %v738
    %v740 = vpop.f32.mrf.mxu0
    %v741 = vadd.f32 %v545, %v740
    %742 = vmatmul.bf16.gmra.mxu0 %v489
    %v743 = vpop.f32.mrf.mxu0
    %v744 = vadd.f32 %v545, %v743
    %v745 = vpop.f32.mrf.mxu0
    %v746 = vadd.f32 %v545, %v745
    %747 = vmatmul.bf16.gmra.mxu0 %v491
    %v748 = vpop.f32.mrf.mxu0
    %v749 = vadd.f32 %v545, %v748
    %v750 = vpop.f32.mrf.mxu0
    %v751 = vadd.f32 %v545, %v750
    %752 = vmatmul.bf16.gmra.mxu0 %v493
    %v753 = vpop.f32.mrf.mxu0
    %v754 = vadd.f32 %v545, %v753
    %v755 = vpop.f32.mrf.mxu0
    %v756 = vadd.f32 %v545, %v755
    %757 = vmatmul.bf16.gmra.mxu0 %v495
    %v758 = vpop.f32.mrf.mxu0
    %v759 = vadd.f32 %v545, %v758
    %v760 = vpop.f32.mrf.mxu0
    %v761 = vadd.f32 %v545, %v760
    %762 = vmatmul.bf16.gmra.mxu0 %v497
    %v763 = vpop.f32.mrf.mxu0
    %v764 = vadd.f32 %v545, %v763
    %v765 = vpop.f32.mrf.mxu0
    %v766 = vadd.f32 %v545, %v765
    %767 = vmatmul.bf16.gmra.mxu0 %v499
    %v768 = vpop.f32.mrf.mxu0
    %v769 = vadd.f32 %v545, %v768
    %v770 = vpop.f32.mrf.mxu0
    %v771 = vadd.f32 %v545, %v770
    %772 = vmatmul.bf16.gmra.mxu0 %v501
    %v773 = vpop.f32.mrf.mxu0
    %v774 = vadd.f32 %v545, %v773
    %v775 = vpop.f32.mrf.mxu0
    %v776 = vadd.f32 %v545, %v775
    %777 = vmatmul.bf16.gmra.mxu0 %v503
    %v778 = vpop.f32.mrf.mxu0
    %v779 = vadd.f32 %v545, %v778
    %v780 = vpop.f32.mrf.mxu0
    %v781 = vadd.f32 %v545, %v780
    %782 = vmatmul.bf16.gmra.mxu0 %v505
    %v783 = vpop.f32.mrf.mxu0
    %v784 = vadd.f32 %v545, %v783
    %v785 = vpop.f32.mrf.mxu0
    %v786 = vadd.f32 %v545, %v785
    %787 = vmatmul.bf16.gmra.mxu0 %v507
    %v788 = vpop.f32.mrf.mxu0
    %v789 = vadd.f32 %v545, %v788
    %v790 = vpop.f32.mrf.mxu0
    %v791 = vadd.f32 %v545, %v790
    %792 = vmatmul.bf16.gmra.mxu0 %v509
    %v793 = vpop.f32.mrf.mxu0
    %v794 = vadd.f32 %v545, %v793
    %v795 = vpop.f32.mrf.mxu0
    %v796 = vadd.f32 %v545, %v795
    %797 = vdwg.mxu0
    %798 = vmatpush.bf16.msra.mxu0 %v675
    %799 = vmatpush.bf16.msra.mxu0 %v673
    %800 = vmatpush.bf16.msra.mxu0 %v671
    %801 = vmatpush.bf16.msra.mxu0 %v669
    %802 = vmatpush.bf16.msra.mxu0 %v667
    %803 = vmatpush.bf16.msra.mxu0 %v665
    %804 = vmatpush.bf16.msra.mxu0 %v663
    %805 = vmatpush.bf16.msra.mxu0 %v661
    %806 = vmatmul.bf16.gmra.mxu0 %v480
    %v807 = vpop.f32.mrf.mxu0
    %v808 = vadd.f32 %v719, %v807
    %v809 = vpop.f32.mrf.mxu0
    %v810 = vadd.f32 %v721, %v809
    %811 = vmatmul.bf16.gmra.mxu0 %v482
    %v812 = vpop.f32.mrf.mxu0
    %v813 = vadd.f32 %v724, %v812
    %v814 = vpop.f32.mrf.mxu0
    %v815 = vadd.f32 %v726, %v814
    %816 = vmatmul.bf16.gmra.mxu0 %v484
    %v817 = vpop.f32.mrf.mxu0
    %v818 = vadd.f32 %v729, %v817
    %v819 = vpop.f32.mrf.mxu0
    %v820 = vadd.f32 %v731, %v819
    %821 = vmatmul.bf16.gmra.mxu0 %v486
    %v822 = vpop.f32.mrf.mxu0
    %v823 = vadd.f32 %v734, %v822
    %v824 = vpop.f32.mrf.mxu0
    %v825 = vadd.f32 %v736, %v824
    %826 = vmatmul.bf16.gmra.mxu0 %v488
    %v827 = vpop.f32.mrf.mxu0
    %v828 = vadd.f32 %v739, %v827
    %v829 = vpop.f32.mrf.mxu0
    %v830 = vadd.f32 %v741, %v829
    %831 = vmatmul.bf16.gmra.mxu0 %v490
    %v832 = vpop.f32.mrf.mxu0
    %v833 = vadd.f32 %v744, %v832
    %v834 = vpop.f32.mrf.mxu0
    %v835 = vadd.f32 %v746, %v834
    %836 = vmatmul.bf16.gmra.mxu0 %v492
    %v837 = vpop.f32.mrf.mxu0
    %v838 = vadd.f32 %v749, %v837
    %v839 = vpop.f32.mrf.mxu0
    %v840 = vadd.f32 %v751, %v839
    %841 = vmatmul.bf16.gmra.mxu0 %v494
    %v842 = vpop.f32.mrf.mxu0
    %v843 = vadd.f32 %v754, %v842
    %v844 = vpop.f32.mrf.mxu0
    %v845 = vadd.f32 %v756, %v844
    %846 = vmatmul.bf16.gmra.mxu0 %v496
    %v847 = vpop.f32.mrf.mxu0
    %v848 = vadd.f32 %v759, %v847
    %v849 = vpop.f32.mrf.mxu0
    %v850 = vadd.f32 %v761, %v849
    %851 = vmatmul.bf16.gmra.mxu0 %v498
    %v852 = vpop.f32.mrf.mxu0
    %v853 = vadd.f32 %v764, %v852
    %v854 = vpop.f32.mrf.mxu0
    %v855 = vadd.f32 %v766, %v854
    %856 = vmatmul.bf16.gmra.mxu0 %v500
    %v857 = vpop.f32.mrf.mxu0
    %v858 = vadd.f32 %v769, %v857
    %v859 = vpop.f32.mrf.mxu0
    %v860 = vadd.f32 %v771, %v859
    %861 = vmatmul.bf16.gmra.mxu0 %v502
    %v862 = vpop.f32.mrf.mxu0
    %v863 = vadd.f32 %v774, %v862
    %v864 = vpop.f32.mrf.mxu0
    %v865 = vadd.f32 %v776, %v864
    %866 = vmatmul.bf16.gmra.mxu0 %v504
    %v867 = vpop.f32.mrf.mxu0
    %v868 = vadd.f32 %v779, %v867
    %v869 = vpop.f32.mrf.mxu0
    %v870 = vadd.f32 %v781, %v869
    %871 = vmatmul.bf16.gmra.mxu0 %v506
    %v872 = vpop.f32.mrf.mxu0
    %v873 = vadd.f32 %v784, %v872
    %v874 = vpop.f32.mrf.mxu0
    %v875 = vadd.f32 %v786, %v874
    %876 = vmatmul.bf16.gmra.mxu0 %v508
    %v877 = vpop.f32.mrf.mxu0
    %v878 = vadd.f32 %v789, %v877
    %v879 = vpop.f32.mrf.mxu0
    %v880 = vadd.f32 %v791, %v879
    %881 = vmatmul.bf16.gmra.mxu0 %v510
    %v882 = vpop.f32.mrf.mxu0
    %v883 = vadd.f32 %v794, %v882
    %v884 = vpop.f32.mrf.mxu0
    %v885 = vadd.f32 %v796, %v884
    %886 = vdwg.mxu0
    %887 = vmatpush.bf16.msra.mxu0 %v660
    %888 = vmatpush.bf16.msra.mxu0 %v658
    %889 = vmatpush.bf16.msra.mxu0 %v656
    %890 = vmatpush.bf16.msra.mxu0 %v654
    %891 = vmatpush.bf16.msra.mxu0 %v652
    %892 = vmatpush.bf16.msra.mxu0 %v650
    %893 = vmatpush.bf16.msra.mxu0 %v648
    %894 = vmatpush.bf16.msra.mxu0 %v646
    %895 = vmatmul.bf16.gmra.mxu0 %v479
    %v896 = vpop.f32.mrf.mxu0
    %v897 = vadd.f32 %v546, %v896
    %v898 = vpop.f32.mrf.mxu0
    %v899 = vadd.f32 %v546, %v898
    %900 = vmatmul.bf16.gmra.mxu0 %v481
    %v901 = vpop.f32.mrf.mxu0
    %v902 = vadd.f32 %v546, %v901
    %v903 = vpop.f32.mrf.mxu0
    %v904 = vadd.f32 %v546, %v903
    %905 = vmatmul.bf16.gmra.mxu0 %v483
    %v906 = vpop.f32.mrf.mxu0
    %v907 = vadd.f32 %v546, %v906
    %v908 = vpop.f32.mrf.mxu0
    %v909 = vadd.f32 %v546, %v908
    %910 = vmatmul.bf16.gmra.mxu0 %v485
    %v911 = vpop.f32.mrf.mxu0
    %v912 = vadd.f32 %v546, %v911
    %v913 = vpop.f32.mrf.mxu0
    %v914 = vadd.f32 %v546, %v913
    %915 = vmatmul.bf16.gmra.mxu0 %v487
    %v916 = vpop.f32.mrf.mxu0
    %v917 = vadd.f32 %v546, %v916
    %v918 = vpop.f32.mrf.mxu0
    %v919 = vadd.f32 %v546, %v918
    %920 = vmatmul.bf16.gmra.mxu0 %v489
    %v921 = vpop.f32.mrf.mxu0
    %v922 = vadd.f32 %v546, %v921
    %v923 = vpop.f32.mrf.mxu0
    %v924 = vadd.f32 %v546, %v923
    %925 = vmatmul.bf16.gmra.mxu0 %v491
    %v926 = vpop.f32.mrf.mxu0
    %v927 = vadd.f32 %v546, %v926
    %v928 = vpop.f32.mrf.mxu0
    %v929 = vadd.f32 %v546, %v928
    %930 = vmatmul.bf16.gmra.mxu0 %v493
    %v931 = vpop.f32.mrf.mxu0
    %v932 = vadd.f32 %v546, %v931
    %v933 = vpop.f32.mrf.mxu0
    %v934 = vadd.f32 %v546, %v933
    %935 = vmatmul.bf16.gmra.mxu0 %v495
    %v936 = vpop.f32.mrf.mxu0
    %v937 = vadd.f32 %v546, %v936
    %v938 = vpop.f32.mrf.mxu0
    %v939 = vadd.f32 %v546, %v938
    %940 = vmatmul.bf16.gmra.mxu0 %v497
    %v941 = vpop.f32.mrf.mxu0
    %v942 = vadd.f32 %v546, %v941
    %v943 = vpop.f32.mrf.mxu0
    %v944 = vadd.f32 %v546, %v943
    %945 = vmatmul.bf16.gmra.mxu0 %v499
    %v946 = vpop.f32.mrf.mxu0
    %v947 = vadd.f32 %v546, %v946
    %v948 = vpop.f32.mrf.mxu0
    %v949 = vadd.f32 %v546, %v948
    %950 = vmatmul.bf16.gmra.mxu0 %v501
    %v951 = vpop.f32.mrf.mxu0
    %v952 = vadd.f32 %v546, %v951
    %v953 = vpop.f32.mrf.mxu0
    %v954 = vadd.f32 %v546, %v953
    %955 = vmatmul.bf16.gmra.mxu0 %v503
    %v956 = vpop.f32.mrf.mxu0
    %v957 = vadd.f32 %v546, %v956
    %v958 = vpop.f32.mrf.mxu0
    %v959 = vadd.f32 %v546, %v958
    %960 = vmatmul.bf16.gmra.mxu0 %v505
    %v961 = vpop.f32.mrf.mxu0
    %v962 = vadd.f32 %v546, %v961
    %v963 = vpop.f32.mrf.mxu0
    %v964 = vadd.f32 %v546, %v963
    %965 = vmatmul.bf16.gmra.mxu0 %v507
    %v966 = vpop.f32.mrf.mxu0
    %v967 = vadd.f32 %v546, %v966
    %v968 = vpop.f32.mrf.mxu0
    %v969 = vadd.f32 %v546, %v968
    %970 = vmatmul.bf16.gmra.mxu0 %v509
    %v971 = vpop.f32.mrf.mxu0
    %v972 = vadd.f32 %v546, %v971
    %v973 = vpop.f32.mrf.mxu0
    %v974 = vadd.f32 %v546, %v973
    %975 = vdwg.mxu0
    %976 = vmatpush.bf16.msra.mxu0 %v676
    %977 = vmatpush.bf16.msra.mxu0 %v674
    %978 = vmatpush.bf16.msra.mxu0 %v672
    %979 = vmatpush.bf16.msra.mxu0 %v670
    %980 = vmatpush.bf16.msra.mxu0 %v668
    %981 = vmatpush.bf16.msra.mxu0 %v666
    %982 = vmatpush.bf16.msra.mxu0 %v664
    %983 = vmatpush.bf16.msra.mxu0 %v662
    %984 = vmatmul.bf16.gmra.mxu0 %v480
    %v985 = vpop.f32.mrf.mxu0
    %v986 = vadd.f32 %v897, %v985
    %v987 = vpop.f32.mrf.mxu0
    %v988 = vadd.f32 %v899, %v987
    %989 = vmatmul.bf16.gmra.mxu0 %v482
    %v990 = vpop.f32.mrf.mxu0
    %v991 = vadd.f32 %v902, %v990
    %v992 = vpop.f32.mrf.mxu0
    %v993 = vadd.f32 %v904, %v992
    %994 = vmatmul.bf16.gmra.mxu0 %v484
    %v995 = vpop.f32.mrf.mxu0
    %v996 = vadd.f32 %v907, %v995
    %v997 = vpop.f32.mrf.mxu0
    %v998 = vadd.f32 %v909, %v997
    %999 = vmatmul.bf16.gmra.mxu0 %v486
    %v1000 = vpop.f32.mrf.mxu0
    %v1001 = vadd.f32 %v912, %v1000
    %v1002 = vpop.f32.mrf.mxu0
    %v1003 = vadd.f32 %v914, %v1002
    %1004 = vmatmul.bf16.gmra.mxu0 %v488
    %v1005 = vpop.f32.mrf.mxu0
    %v1006 = vadd.f32 %v917, %v1005
    %v1007 = vpop.f32.mrf.mxu0
    %v1008 = vadd.f32 %v919, %v1007
    %1009 = vmatmul.bf16.gmra.mxu0 %v490
    %v1010 = vpop.f32.mrf.mxu0
    %v1011 = vadd.f32 %v922, %v1010
    %v1012 = vpop.f32.mrf.mxu0
    %v1013 = vadd.f32 %v924, %v1012
    %1014 = vmatmul.bf16.gmra.mxu0 %v492
    %v1015 = vpop.f32.mrf.mxu0
    %v1016 = vadd.f32 %v927, %v1015
    %v1017 = vpop.f32.mrf.mxu0
    %v1018 = vadd.f32 %v929, %v1017
    %1019 = vmatmul.bf16.gmra.mxu0 %v494
    %v1020 = vpop.f32.mrf.mxu0
    %v1021 = vadd.f32 %v932, %v1020
    %v1022 = vpop.f32.mrf.mxu0
    %v1023 = vadd.f32 %v934, %v1022
    %1024 = vmatmul.bf16.gmra.mxu0 %v496
    %v1025 = vpop.f32.mrf.mxu0
    %v1026 = vadd.f32 %v937, %v1025
    %v1027 = vpop.f32.mrf.mxu0
    %v1028 = vadd.f32 %v939, %v1027
    %1029 = vmatmul.bf16.gmra.mxu0 %v498
    %v1030 = vpop.f32.mrf.mxu0
    %v1031 = vadd.f32 %v942, %v1030
    %v1032 = vpop.f32.mrf.mxu0
    %v1033 = vadd.f32 %v944, %v1032
    %1034 = vmatmul.bf16.gmra.mxu0 %v500
    %v1035 = vpop.f32.mrf.mxu0
    %v1036 = vadd.f32 %v947, %v1035
    %v1037 = vpop.f32.mrf.mxu0
    %v1038 = vadd.f32 %v949, %v1037
    %1039 = vmatmul.bf16.gmra.mxu0 %v502
    %v1040 = vpop.f32.mrf.mxu0
    %v1041 = vadd.f32 %v952, %v1040
    %v1042 = vpop.f32.mrf.mxu0
    %v1043 = vadd.f32 %v954, %v1042
    %1044 = vmatmul.bf16.gmra.mxu0 %v504
    %v1045 = vpop.f32.mrf.mxu0
    %v1046 = vadd.f32 %v957, %v1045
    %v1047 = vpop.f32.mrf.mxu0
    %v1048 = vadd.f32 %v959, %v1047
    %1049 = vmatmul.bf16.gmra.mxu0 %v506
    %v1050 = vpop.f32.mrf.mxu0
    %v1051 = vadd.f32 %v962, %v1050
    %v1052 = vpop.f32.mrf.mxu0
    %v1053 = vadd.f32 %v964, %v1052
    %1054 = vmatmul.bf16.gmra.mxu0 %v508
    %v1055 = vpop.f32.mrf.mxu0
    %v1056 = vadd.f32 %v967, %v1055
    %v1057 = vpop.f32.mrf.mxu0
    %v1058 = vadd.f32 %v969, %v1057
    %1059 = vmatmul.bf16.gmra.mxu0 %v510
    %v1060 = vpop.f32.mrf.mxu0
    %v1061 = vadd.f32 %v972, %v1060
    %v1062 = vpop.f32.mrf.mxu0
    %v1063 = vadd.f32 %v974, %v1062
    %1064 = vdwg.mxu0
    %v1065 = vmax.f32 %v808, 0.0
    %v1066 = vmax.f32 %v986, 0.0
    %v1067 = vmax.f32 %v810, 0.0
    %v1068 = vmax.f32 %v988, 0.0
    %v1069 = vmax.f32 %v813, 0.0
    %v1070 = vmax.f32 %v991, 0.0
    %v1071 = vmax.f32 %v815, 0.0
    %v1072 = vmax.f32 %v993, 0.0
    %v1073 = vmax.f32 %v818, 0.0
    %v1074 = vmax.f32 %v996, 0.0
    %v1075 = vmax.f32 %v820, 0.0
    %v1076 = vmax.f32 %v998, 0.0
    %v1077 = vmax.f32 %v823, 0.0
    %v1078 = vmax.f32 %v1001, 0.0
    %v1079 = vmax.f32 %v825, 0.0
    %v1080 = vmax.f32 %v1003, 0.0
    %v1081 = vmax.f32 %v828, 0.0
    %v1082 = vmax.f32 %v1006, 0.0
    %v1083 = vmax.f32 %v830, 0.0
    %v1084 = vmax.f32 %v1008, 0.0
    %v1085 = vmax.f32 %v833, 0.0
    %v1086 = vmax.f32 %v1011, 0.0
    %v1087 = vmax.f32 %v835, 0.0
    %v1088 = vmax.f32 %v1013, 0.0
    %v1089 = vmax.f32 %v838, 0.0
    %v1090 = vmax.f32 %v1016, 0.0
    %v1091 = vmax.f32 %v840, 0.0
    %v1092 = vmax.f32 %v1018, 0.0
    %v1093 = vmax.f32 %v843, 0.0
    %v1094 = vmax.f32 %v1021, 0.0
    %v1095 = vmax.f32 %v845, 0.0
    %v1096 = vmax.f32 %v1023, 0.0
    %v1097 = vmax.f32 %v848, 0.0
    %v1098 = vmax.f32 %v1026, 0.0
    %v1099 = vmax.f32 %v850, 0.0
    %v1100 = vmax.f32 %v1028, 0.0
    %v1101 = vmax.f32 %v853, 0.0
    %v1102 = vmax.f32 %v1031, 0.0
    %v1103 = vmax.f32 %v855, 0.0
    %v1104 = vmax.f32 %v1033, 0.0
    %v1105 = vmax.f32 %v858, 0.0
    %v1106 = vmax.f32 %v1036, 0.0
    %v1107 = vmax.f32 %v860, 0.0
    %v1108 = vmax.f32 %v1038, 0.0
    %v1109 = vmax.f32 %v863, 0.0
    %v1110 = vmax.f32 %v1041, 0.0
    %v1111 = vmax.f32 %v865, 0.0
    %v1112 = vmax.f32 %v1043, 0.0
    %v1113 = vmax.f32 %v868, 0.0
    %v1114 = vmax.f32 %v1046, 0.0
    %v1115 = vmax.f32 %v870, 0.0
    %v1116 = vmax.f32 %v1048, 0.0
    %v1117 = vmax.f32 %v873, 0.0
    %v1118 = vmax.f32 %v1051, 0.0
    %v1119 = vmax.f32 %v875, 0.0
    %v1120 = vmax.f32 %v1053, 0.0
    %v1121 = vmax.f32 %v878, 0.0
    %v1122 = vmax.f32 %v1056, 0.0
    %v1123 = vmax.f32 %v880, 0.0
    %v1124 = vmax.f32 %v1058, 0.0
    %v1125 = vmax.f32 %v883, 0.0
    %v1126 = vmax.f32 %v1061, 0.0
    %v1127 = vmax.f32 %v885, 0.0
    %v1128 = vmax.f32 %v1063, 0.0
    %v1129 = vpack.c.bf16 %v1067, %v1065
    %v1130 = vpack.c.bf16 %v1068, %v1066
    %v1131 = vpack.c.bf16 %v1071, %v1069
    %v1132 = vpack.c.bf16 %v1072, %v1070
    %v1133 = vpack.c.bf16 %v1075, %v1073
    %v1134 = vpack.c.bf16 %v1076, %v1074
    %v1135 = vpack.c.bf16 %v1079, %v1077
    %v1136 = vpack.c.bf16 %v1080, %v1078
    %v1137 = vpack.c.bf16 %v1083, %v1081
    %v1138 = vpack.c.bf16 %v1084, %v1082
    %v1139 = vpack.c.bf16 %v1087, %v1085
    %v1140 = vpack.c.bf16 %v1088, %v1086
    %v1141 = vpack.c.bf16 %v1091, %v1089
    %v1142 = vpack.c.bf16 %v1092, %v1090
    %v1143 = vpack.c.bf16 %v1095, %v1093
    %v1144 = vpack.c.bf16 %v1096, %v1094
    %v1145 = vpack.c.bf16 %v1099, %v1097
    %v1146 = vpack.c.bf16 %v1100, %v1098
    %v1147 = vpack.c.bf16 %v1103, %v1101
    %v1148 = vpack.c.bf16 %v1104, %v1102
    %v1149 = vpack.c.bf16 %v1107, %v1105
    %v1150 = vpack.c.bf16 %v1108, %v1106
    %v1151 = vpack.c.bf16 %v1111, %v1109
    %v1152 = vpack.c.bf16 %v1112, %v1110
    %v1153 = vpack.c.bf16 %v1115, %v1113
    %v1154 = vpack.c.bf16 %v1116, %v1114
    %v1155 = vpack.c.bf16 %v1119, %v1117
    %v1156 = vpack.c.bf16 %v1120, %v1118
    %v1157 = vpack.c.bf16 %v1123, %v1121
    %v1158 = vpack.c.bf16 %v1124, %v1122
    %v1159 = vpack.c.bf16 %v1127, %v1125
    %v1160 = vpack.c.bf16 %v1128, %v1126
    %v1161 = vld [vmem:[%s5] sm:$0x3]
    %v1162 = vld [vmem:[#allocation2] sm:$0x1]
    %1164 = vset.pattern.permute.xlu0 0
    %1165 = vperm.xlu0 %1164, %v1162
    %v1166 = vpop.permute.xlu0 %1165
    %v1168 = vperm.slane %v1166, 0
    %1170 = vst [vmem:[#allocation1] ss:$9 sm:$0xff] %v1161
    %v1171 = vld [vmem:[#allocation1] sm:$0xff]
    %v1172 = vld [vmem:[#allocation1 + $0x9] sm:$0xff]
    %1175 = vmatpush.bf16.xpose.msra.mxu0 %v1143
    %1176 = vmatpush.bf16.xpose.msra.mxu0 %v1141
    %1177 = vmatpush.bf16.xpose.msra.mxu0 %v1139
    %1178 = vmatpush.bf16.xpose.msra.mxu0 %v1137
    %1179 = vmatpush.bf16.xpose.msra.mxu0 %v1135
    %1180 = vmatpush.bf16.xpose.msra.mxu0 %v1133
    %1181 = vmatpush.bf16.xpose.msra.mxu0 %v1131
    %1182 = vmatpush.bf16.xpose.msra.mxu0 %v1129
    %1183 = vmatmul.bf16.gmra.mxu0 %v1171
    %v1184 = vpop.f32.mrf.mxu0
    %v1185 = vadd.f32 %v1168, %v1184
    %v1186 = vpop.f32.mrf.mxu0
    %1187 = vdwg.mxu0
    %1188 = vmatpush.bf16.xpose.msra.mxu0 %v1144
    %1189 = vmatpush.bf16.xpose.msra.mxu0 %v1142
    %1190 = vmatpush.bf16.xpose.msra.mxu0 %v1140
    %1191 = vmatpush.bf16.xpose.msra.mxu0 %v1138
    %1192 = vmatpush.bf16.xpose.msra.mxu0 %v1136
    %1193 = vmatpush.bf16.xpose.msra.mxu0 %v1134
    %1194 = vmatpush.bf16.xpose.msra.mxu0 %v1132
    %1195 = vmatpush.bf16.xpose.msra.mxu0 %v1130
    %1196 = vmatmul.bf16.gmra.mxu0 %v1172
    %v1197 = vpop.f32.mrf.mxu0
    %v1198 = vadd.f32 %v1185, %v1197
    %v1199 = vpop.f32.mrf.mxu0
    %1200 = vdwg.mxu0
    %1201 = vmatpush.bf16.xpose.msra.mxu0 %v1159
    %1202 = vmatpush.bf16.xpose.msra.mxu0 %v1157
    %1203 = vmatpush.bf16.xpose.msra.mxu0 %v1155
    %1204 = vmatpush.bf16.xpose.msra.mxu0 %v1153
    %1205 = vmatpush.bf16.xpose.msra.mxu0 %v1151
    %1206 = vmatpush.bf16.xpose.msra.mxu0 %v1149
    %1207 = vmatpush.bf16.xpose.msra.mxu0 %v1147
    %1208 = vmatpush.bf16.xpose.msra.mxu0 %v1145
    %1209 = vmatmul.bf16.gmra.mxu0 %v1171
    %v1210 = vpop.f32.mrf.mxu0
    %v1211 = vadd.f32 %v1168, %v1210
    %v1212 = vpop.f32.mrf.mxu0
    %1213 = vdwg.mxu0
    %1214 = vmatpush.bf16.xpose.msra.mxu0 %v1160
    %1215 = vmatpush.bf16.xpose.msra.mxu0 %v1158
    %1216 = vmatpush.bf16.xpose.msra.mxu0 %v1156
    %1217 = vmatpush.bf16.xpose.msra.mxu0 %v1154
    %1218 = vmatpush.bf16.xpose.msra.mxu0 %v1152
    %1219 = vmatpush.bf16.xpose.msra.mxu0 %v1150
    %1220 = vmatpush.bf16.xpose.msra.mxu0 %v1148
    %1221 = vmatpush.bf16.xpose.msra.mxu0 %v1146
    %1222 = vmatmul.bf16.gmra.mxu0 %v1172
    %v1223 = vpop.f32.mrf.mxu0
    %v1224 = vadd.f32 %v1211, %v1223
    %v1225 = vpop.f32.mrf.mxu0
    %1226 = vdwg.mxu0
    %v1229 = vrot.slane %v1224, 7
    %vm1230 = vcmask 1040384
    %v1231 = vsel %vm1230, %v1198, %v1229
    %v1233 = vlaneseq
    %vm1234 = vcmp.ge.s32.totalorder %v1233, 0
    %vm1235 = vcmp.lt.s32.totalorder %v1233, 256
    %vm1236 = vmand %vm1234, %vm1235
    %1237 = vst.msk [vmem:[#allocation6] sm:$0x3] %vm1236, %v1231
    // Predicated region
    $region34: #{tpu_custom_call.1} parent=1 // pred_check
      _
    $region35: #{tpu_custom_call.1} parent=1 // pred_check_branch
      %1239 = sbr.rel (0) target = $region37
    $region36: #{tpu_custom_call.1} parent=1 // pred_region
      %1241 = vsyncadd [#allocation5], 0
      %s1243 = sshll.u32 [#allocation6], 4
      %s1244 = int_to_ptr.vmem [resolvable:$true] %s1243
      %s1245 = sshll.u32 %s7, 4
      %s1246 = int_to_ptr.hbm [resolvable:$true] %s1245
      %1248 = dma.vmem_to_hbm [thread:$0]  %s1244, 32, %s1246, [#allocation5]
    $region37: #{tpu_custom_call.1} parent=1 // pred_fallthru
      _
    // Predicated region
    $region38: #{tpu_custom_call.1} parent=1 // pred_check
      _
    $region39: #{tpu_custom_call.1} parent=1 // pred_check_branch
      %1250 = sbr.rel (0) target = $region41
    $region40: #{tpu_custom_call.1} parent=1 // pred_region
      %1252 = dma.done [#allocation5], 32
    $region41: #{tpu_custom_call.1} parent=1 // pred_fallthru
      _
    %1253 = vsyncpa [#allocation4], 1
    %1254 = vsyncpa [#allocation5], 1

</llo_original>
